<compile_context>
chip_gen: v7x
topology: tpu7x:2x2x1
jax: 0.10.0
libtpu: 0.0.40
codegen_flags: <defaults>
</compile_context>

<pallas_src>
import functools

import jax
import jax.numpy as jnp
import numpy as np
from jax.experimental import pallas as pl
from jax.experimental.pallas import tpu as pltpu


# ---------------------------------------------------------------------------
# Per-generation budgets and tile selection
# ---------------------------------------------------------------------------
def _vmem_budget():
    """Returns (vmem_limit_bytes, x_tile_target_bytes) sized per TPU generation."""
    try:
        cap = pltpu.get_tpu_info().vmem_capacity_bytes
    except Exception:
        cap = 64 * 1024 * 1024                       # be v7x-safe if the query fails
    if cap >= 100 * 1024 * 1024:                     # v5e / v6e: 128 MiB physical VMEM
        return 64 * 1024 * 1024, 8 * 1024 * 1024
    return 40 * 1024 * 1024, 4 * 1024 * 1024         # v7x: 64 MiB physical VMEM


def _max_cols(batch, x_itemsize, vmem_limit, x_tile_target):
    """Max number of (channel, length) columns per block.

    Budgets the double-buffered working set of the forward pass
    (x tile + y tile + packed f32 params tile) against ~3/4 of the scoped VMEM
    limit, and additionally caps the x tile at the per-generation target so the
    per-grid-step pipeline overhead (~0.35 us) stays well amortized.
    """
    per_col_ws = 2 * (2 * batch * x_itemsize + 2 * 4)     # double-buffered bytes / column
    max_cols_ws = ((vmem_limit * 3) // 4) // per_col_ws
    max_cols_tile = max(1, x_tile_target // (batch * x_itemsize))
    return max(8 * 128, min(max_cols_ws, max_cols_tile))


def _choose_tiles(C, L, max_cols):
    """Pick (tc, tl) so tc*tl <= max_cols and blocks satisfy the (8,128) rule.

    Full-dim blocks are always legal, so small / unaligned dims fall back to the
    full extent; otherwise tiles are multiples of (8, 128), preferring exact
    divisors (ragged tails via pl.cdiv still work if a caller forces a tile).
    """
    # Length tile: full L unless it is 128-aligned and too large for the budget.
    if L % 128 == 0 and L > 128 and min(C, 8) * L > max_cols:
        tc_min = min(C, 8)
        max_tl = max(128, (max_cols // tc_min) // 128 * 128)
        tl = 128
        for cand in range(min(L, max_tl), 127, -128):
            if L % cand == 0:
                tl = cand
                break
    else:
        tl = L

    # Channel tile: full C when it fits (or when C <= 8 and can't be subdivided).
    if C <= 8 or C * tl <= max_cols:
        tc = C
    else:
        c8 = (C // 8) * 8
        max_tc = max(8, min((max_cols // tl) // 8 * 8, c8))
        tc = None
        for cand in range(max_tc, 7, -8):
            if C % cand == 0:
                tc = cand
                break
        if tc is None:
            tc = max_tc            # no exact divisor: pl.cdiv handles the ragged tail
    return tc, tl


# ---------------------------------------------------------------------------
# Kernel 1: data-dependent initialization (mean / unbiased std over batch dim)
# Block is (B, tc, tl): the batch reduction stays inside the block (leading-axis
# VPU reduce), so no cross-step accumulator is needed.
# ---------------------------------------------------------------------------
def _actnorm_init_kernel(x_ref, params_ref, *, eps, batch):
    x = x_ref[...].astype(jnp.float32)                      # (B, tc, tl)
    mean = jnp.mean(x, axis=0)                              # (tc, tl)
    # torch.std default is unbiased (ddof=1).  NOTE: B == 1 yields NaN exactly
    # like the PyTorch reference (0/0) -- same edge-case behavior on purpose.
    var = jnp.sum((x - mean) ** 2, axis=0) / jnp.float32(batch - 1)
    scale = 1.0 / (jnp.sqrt(var) + jnp.float32(eps))
    params_ref[0] = scale                                   # packed params: [scale, bias]
    params_ref[1] = -mean


def actnorm_init(x, eps, tile_c=None, tile_l=None):
    B, C, L = x.shape
    vmem_limit, x_tile_target = _vmem_budget()
    tc, tl = _choose_tiles(C, L, _max_cols(B, x.dtype.itemsize, vmem_limit, x_tile_target))
    if tile_c is not None:
        tc = tile_c
    if tile_l is not None:
        tl = tile_l
    gc, gl = pl.cdiv(C, tc), pl.cdiv(L, tl)

    kernel = functools.partial(_actnorm_init_kernel, eps=eps, batch=B)
    params = pl.pallas_call(
        kernel,
        out_shape=jax.ShapeDtypeStruct((2, C, L), jnp.float32),
        grid=(gc, gl),
        in_specs=[pl.BlockSpec((B, tc, tl), lambda c, l: (0, c, l))],
        out_specs=pl.BlockSpec((2, tc, tl), lambda c, l: (0, c, l)),
        compiler_params=pltpu.CompilerParams(
            dimension_semantics=("parallel", "parallel"),
            vmem_limit_bytes=vmem_limit,
        ),
    )(x)

    # scale is a frozen parameter after init -> compute log-det once and cache it
    # (one-time reduction; keeps the hot forward kernel purely elementwise).
    log_det = jnp.sum(jnp.log(jnp.abs(params[0])))
    return params, log_det


# ---------------------------------------------------------------------------
# Kernel 2: affine transform (hot path).  y = scale * (x + bias), exactly the
# reference expression.  params is the packed (2, C, L) [scale, bias] array
# (one DMA stream); blocks broadcast over the batch-tile dimension.
# ---------------------------------------------------------------------------
def _actnorm_fwd_kernel(x_ref, params_ref, y_ref):
    scale = params_ref[0]                                   # (tc, tl)
    bias = params_ref[1]                                    # (tc, tl)
    y_ref[...] = (scale * (x_ref[...] + bias)).astype(y_ref.dtype)


def actnorm_forward(x, params, tile_c=None, tile_l=None):
    B, C, L = x.shape
    assert params.shape == (2, C, L)
    vmem_limit, x_tile_target = _vmem_budget()
    tc, tl = _choose_tiles(C, L, _max_cols(B, x.dtype.itemsize, vmem_limit, x_tile_target))
    if tile_c is not None:
        tc = tile_c
    if tile_l is not None:
        tl = tile_l
    gc, gl = pl.cdiv(C, tc), pl.cdiv(L, tl)

    # Give the pipeline / second TensorCore (v7x) at least 2 grid steps by
    # splitting the batch when the (C, L) grid collapses to a single block.
    tb = B if (gc * gl >= 2 or B <= 1) else max(1, B // 2)
    gb = pl.cdiv(B, tb)

    y = pl.pallas_call(
        _actnorm_fwd_kernel,
        out_shape=jax.ShapeDtypeStruct((B, C, L), x.dtype),
        grid=(gb, gc, gl),
        in_specs=[
            pl.BlockSpec((tb, tc, tl), lambda b, c, l: (b, c, l)),
            pl.BlockSpec((2, tc, tl), lambda b, c, l: (0, c, l)),
        ],
        out_specs=pl.BlockSpec((tb, tc, tl), lambda b, c, l: (b, c, l)),
        compiler_params=pltpu.CompilerParams(
            dimension_semantics=("parallel", "parallel", "parallel"),
            vmem_limit_bytes=vmem_limit,
        ),
    )(x, params)
    return y


# ---------------------------------------------------------------------------
# Module-like wrapper mirroring the PyTorch Actnorm
# ---------------------------------------------------------------------------
class Actnorm:
    def __init__(self, in_channels, signal_len, epsilon=1e-06):
        scale = jnp.ones((1, in_channels, signal_len), jnp.float32)
        bias = jnp.zeros((1, in_channels, signal_len), jnp.float32)
        self.params = jnp.concatenate([scale, bias], axis=0)   # packed (2, C, L)
        self.log_det = jnp.zeros((), jnp.float32)               # sum(log|1|) == 0
        self.epsilon = float(epsilon)
        self.initialized = False

    @property
    def scale(self):
        return self.params[0:1]

    @property
    def bias(self):
        return self.params[1:2]

    def init_weights(self, x):
        self.params, self.log_det = actnorm_init(x, self.epsilon)
        self.initialized = True

    def forward(self, x, w_log_det=True):
        if not self.initialized:
            self.init_weights(x)
        y = actnorm_forward(x, self.params)
        if w_log_det:
            return y, self.log_det
        return y

    def reverse(self, y):
        # plain elementwise inverse (not the hot path of forward)
        return y / self.scale - self.bias


def _reference(x, eps):
    mean = jnp.mean(x, axis=0, keepdims=True)
    std = jnp.std(x, axis=0, ddof=1, keepdims=True)
    scale = 1.0 / (std + eps)
    y = scale * (x - mean)
    ld = jnp.sum(jnp.log(jnp.abs(scale)))
    return y, ld


if __name__ == "__main__":
    key = jax.random.PRNGKey(0)
    k1, k2 = jax.random.split(key)

    # --- test 1: small shape matching the module's (1, C, L) parameters ------
    # (C, L) fits in one block -> forward grid splits the batch: grid = (2, 1, 1).
    B, C, L = 2, 4, 16
    x = jax.random.normal(k1, (B, C, L), dtype=jnp.float32)

    model = Actnorm(in_channels=C, signal_len=L)
    y, log_det = model.forward(x, w_log_det=True)
    y = jax.block_until_ready(y)
    log_det = jax.block_until_ready(log_det)

    y_ref, ld_ref = _reference(x, model.epsilon)
    np.testing.assert_allclose(np.asarray(y), np.asarray(y_ref), rtol=1e-5, atol=1e-5)
    np.testing.assert_allclose(np.asarray(log_det), np.asarray(ld_ref), rtol=1e-5, atol=1e-5)

    # --- test 2: forced (8, 128)-aligned multi-tile grid over (C, L) ----------
    B2, C2, L2 = 2, 16, 256    # tile_c=8, tile_l=128 -> init grid (2,2), fwd grid (1,2,2)
    x2 = jax.random.normal(k2, (B2, C2, L2), dtype=jnp.float32)
    eps = 1e-6
    params2, ld2 = actnorm_init(x2, eps, tile_c=8, tile_l=128)
    y2 = jax.block_until_ready(actnorm_forward(x2, params2, tile_c=8, tile_l=128))
    ld2 = jax.block_until_ready(ld2)

    y2_ref, ld2_ref = _reference(x2, eps)
    np.testing.assert_allclose(np.asarray(y2), np.asarray(y2_ref), rtol=1e-5, atol=1e-5)
    np.testing.assert_allclose(np.asarray(ld2), np.asarray(ld2_ref), rtol=1e-5, atol=1e-5)

    print("KERNEL_OK")
</pallas_src>

<mosaic_0001>
module attributes {stable_mosaic.version = 11 : i64} {
  func.func @_actnorm_init_kernel(%arg0: i32, %arg1: i32, %arg2: memref<2x4x16xf32, #tpu.memory_space<vmem>>, %arg3: memref<2x4x16xf32, #tpu.memory_space<vmem>>) attributes {dimension_semantics = [#tpu.dimension_semantics<parallel>, #tpu.dimension_semantics<parallel>], iteration_bounds = array<i64: 1, 1>, scalar_prefetch = 0 : i64, scratch_operands = 0 : i64, tpu.core_type = #tpu.core_type<tc>, window_params = [{transform_indices = @transform_0, window_bounds = array<i64: 2, 4, 16>}, {transform_indices = @transform_1, window_bounds = array<i64: 2, 4, 16>}]} {
    %c0 = arith.constant 0 : index
    %c0_0 = arith.constant 0 : index
    %c0_1 = arith.constant 0 : index
    %0 = vector.load %arg2[%c0, %c0_0, %c0_1] : memref<2x4x16xf32, #tpu.memory_space<vmem>>, vector<2x4x16xf32>
    %cst = arith.constant dense<0.000000e+00> : vector<4x16xf32>
    %1 = vector.multi_reduction <add>, %0, %cst [0] : vector<2x4x16xf32> to vector<4x16xf32>
    %cst_2 = arith.constant 2.000000e+00 : f32
    %2 = vector.broadcast %cst_2 : f32 to vector<4x16xf32>
    %3 = arith.divf %1, %2 : vector<4x16xf32>
    %4 = vector.shape_cast %3 : vector<4x16xf32> to vector<1x4x16xf32>
    %5 = vector.broadcast %4 : vector<1x4x16xf32> to vector<2x4x16xf32>
    %6 = arith.subf %0, %5 : vector<2x4x16xf32>
    %7 = arith.mulf %6, %6 : vector<2x4x16xf32>
    %cst_3 = arith.constant dense<0.000000e+00> : vector<4x16xf32>
    %8 = vector.multi_reduction <add>, %7, %cst_3 [0] : vector<2x4x16xf32> to vector<4x16xf32>
    %cst_4 = arith.constant 1.000000e+00 : f32
    %9 = vector.broadcast %cst_4 : f32 to vector<4x16xf32>
    %10 = arith.divf %8, %9 : vector<4x16xf32>
    %11 = math.sqrt %10 : vector<4x16xf32>
    %cst_5 = arith.constant 9.99999997E-7 : f32
    %12 = vector.broadcast %cst_5 : f32 to vector<4x16xf32>
    %13 = arith.addf %11, %12 : vector<4x16xf32>
    %cst_6 = arith.constant 1.000000e+00 : f32
    %14 = vector.broadcast %cst_6 : f32 to vector<4x16xf32>
    %15 = arith.divf %14, %13 : vector<4x16xf32>
    %c0_7 = arith.constant 0 : index
    %c0_8 = arith.constant 0 : index
    %c0_9 = arith.constant 0 : index
    %16 = vector.load %arg3[%c0_7, %c0_8, %c0_9] : memref<2x4x16xf32, #tpu.memory_space<vmem>>, vector<1x4x16xf32>
    %17 = vector.shape_cast %16 : vector<1x4x16xf32> to vector<4x16xf32>
    %18 = vector.shape_cast %15 : vector<4x16xf32> to vector<1x4x16xf32>
    tpu.vector_store %arg3[%c0_7, %c0_8, %c0_9], %18 {strides = array<i32>} : memref<2x4x16xf32, #tpu.memory_space<vmem>>, vector<1x4x16xf32>,
    %cst_10 = arith.constant 0.000000e+00 : f32
    %19 = vector.broadcast %cst_10 : f32 to vector<4x16xf32>
    %20 = arith.subf %19, %3 : vector<4x16xf32>
    %c1 = arith.constant 1 : index
    %c0_11 = arith.constant 0 : index
    %c0_12 = arith.constant 0 : index
    %21 = vector.load %arg3[%c1, %c0_11, %c0_12] : memref<2x4x16xf32, #tpu.memory_space<vmem>>, vector<1x4x16xf32>
    %22 = vector.shape_cast %21 : vector<1x4x16xf32> to vector<4x16xf32>
    %23 = vector.shape_cast %20 : vector<4x16xf32> to vector<1x4x16xf32>
    tpu.vector_store %arg3[%c1, %c0_11, %c0_12], %23 {strides = array<i32>} : memref<2x4x16xf32, #tpu.memory_space<vmem>>, vector<1x4x16xf32>,
    return
  }
  func.func @transform_0(%arg0: i32, %arg1: i32) -> (i32, i32, i32) {
    %c0_i32 = arith.constant 0 : i32
    %c0_i32_0 = arith.constant 0 : i32
    return %c0_i32, %arg0, %arg1 : i32, i32, i32
  }
  func.func @transform_1(%arg0: i32, %arg1: i32) -> (i32, i32, i32) {
    %c0_i32 = arith.constant 0 : i32
    %c0_i32_0 = arith.constant 0 : i32
    return %c0_i32, %arg0, %arg1 : i32, i32, i32
  }
}

</mosaic_0001>

<llo_original>
// kernel: tpu_custom_call.1
$region0: #{tpu_custom_call.1}
  #allocation0 [shape = 'u32[]', space=smem, size = 0x4, offset = 0x4, fixed_abs, tag = 'smem constant byte address 0x4 - core index']
  #allocation1 [shape = 'u32[144,128]{1,0:T(1,128)}', space=vmem, size = 0x12000, scoped, tag = 'internal scratch']
  %s0 = inlined_call_operand.hbm [shape: f32[2,4,16], index: 0, kind: input, shape index: {}]
  %s1 = inlined_call_operand.hbm [shape: f32[2,4,16], index: 1, kind: output, shape index: {}]
  %s2 = sld [smem:[#allocation0]]
  $region18: #{tpu_custom_call.1} parent=0
    _
  %s4 = ssub.s32 1, %s2
  %s5 = scalar_select 0, %s4, %s2
  $region1: #{tpu_custom_call.1} parent=0
    #allocation2 [shape = 'u8[4096]{0}', space=vmem, size = 0x1000, scoped, tag = 'input window, operand 0, single buffered']
    #allocation3 [shape = 's32[1]{0}', space=sflag, size = 0x4, scoped, tag = 'scoped memory for tpu_custom_call.1']
    #allocation4 [shape = 's32[1]{0}', space=sflag, size = 0x4, scoped, tag = 'scoped memory for tpu_custom_call.1']
    #allocation5 [shape = 'u8[4096]{0}', space=vmem, size = 0x1000, scoped, tag = 'output window, operand 0, single buffered']
    %6 = vsyncpa [#allocation3], 0
    %7 = vsyncpa [#allocation4], 0
    // Predicated region
    $region2: #{tpu_custom_call.1} parent=1 // pred_check
      _
    $region3: #{tpu_custom_call.1} parent=1 // pred_check_branch
      %9 = sbr.rel (0) target = $region5
    $region4: #{tpu_custom_call.1} parent=1 // pred_region
      %s11 = ssub.s32 128, 128
      %12 = vsyncadd [#allocation3], %s11
      %s13 = sshll.u32 [#allocation2], 4
      %s14 = int_to_ptr.vmem [resolvable:$true] %s13
      %19 = dma.hbm_to_vmem [thread:$0]  %s0, 128, %s14, [#allocation3], 64, 64, 4
    $region5: #{tpu_custom_call.1} parent=1 // pred_fallthru
      _
    // Predicated region
    $region6: #{tpu_custom_call.1} parent=1 // pred_check
      _
    $region7: #{tpu_custom_call.1} parent=1 // pred_check_branch
      %21 = sbr.rel (0) target = $region9
    $region8: #{tpu_custom_call.1} parent=1 // pred_region
      %22 = dma.done [#allocation3], 128
    $region9: #{tpu_custom_call.1} parent=1 // pred_fallthru
      _
    %v23 = vld [vmem:[#allocation2] sm:$0xf]
    %v24 = vld [vmem:[#allocation2 + $0x4] sm:$0xf]
    %vm25 = vcmask 125952
    %v26 = vsel %vm25, %v23, 0.0
    %v27 = vsel %vm25, %v24, 0.0
    %v28 = vadd.f32 %v26, %v27
    %v29 = vrcp.pop 2.0
    %v30 = vmul.f32 %v28, %v29
    %v31 = vsub.f32 %v23, %v30
    %v32 = vsub.f32 %v24, %v30
    %v33 = vmul.f32 %v31, %v31
    %v34 = vmul.f32 %v32, %v32
    %v35 = vsel %vm25, %v33, 0.0
    %v36 = vsel %vm25, %v34, 0.0
    %v37 = vadd.f32 %v35, %v36
    %v38 = vrsqrt.pop %v37
    %v39 = vmul.f32 %v37, %v38
    %vm40 = vcmp.eq.f32.partialorder %v37, inf
    %v41 = vsel %vm40, %v37, %v39
    %vm42 = vcmp.eq.f32.partialorder %v37, 0.0
    %v43 = vand.u32 %v37, 2147483648
    %v44 = vsel %vm42, %v43, %v41
    %v45 = vadd.f32 %v44, 1e-06
    %v46 = vrcp.pop %v45
    %v47 = vmul.f32 1.0, %v46
    %48 = vst.msk [vmem:[#allocation5] sm:$0xf] %vm25, %v47
    %v49 = vsub.f32 0.0, %v30
    %s50 = scalar_lea.vmem [#allocation5], 4
    %51 = vst.msk [vmem:[%s50] sm:$0xf] %vm25, %v49
    // Predicated region
    $region10: #{tpu_custom_call.1} parent=1 // pred_check
      _
    $region11: #{tpu_custom_call.1} parent=1 // pred_check_branch
      %53 = sbr.rel (0) target = $region13
    $region12: #{tpu_custom_call.1} parent=1 // pred_region
      %s55 = ssub.s32 128, 128
      %56 = vsyncadd [#allocation4], %s55
      %s57 = sshll.u32 [#allocation5], 4
      %s58 = int_to_ptr.vmem [resolvable:$true] %s57
      %63 = dma.vmem_to_hbm [thread:$0]  %s58, 128, %s1, [#allocation4], 64, 64, 4
    $region13: #{tpu_custom_call.1} parent=1 // pred_fallthru
      _
    // Predicated region
    $region14: #{tpu_custom_call.1} parent=1 // pred_check
      _
    $region15: #{tpu_custom_call.1} parent=1 // pred_check_branch
      %65 = sbr.rel (0) target = $region17
    $region16: #{tpu_custom_call.1} parent=1 // pred_region
      %66 = dma.done [#allocation4], 128
    $region17: #{tpu_custom_call.1} parent=1 // pred_fallthru
      _
    %67 = vsyncpa [#allocation3], 1
    %68 = vsyncpa [#allocation4], 1

</llo_original>
